<compile_context>
chip_gen: v6e
topology: v6e:2x2x1
jax: 0.10.0
libtpu: 0.0.40
codegen_flags: <defaults>
</compile_context>

<pallas_src>
import numpy as np
import jax
import jax.numpy as jnp
from jax.experimental import pallas as pl
from jax.experimental.pallas import tpu as pltpu


# ---------------- configuration (mirrors the PyTorch `params` dict) ----------------
PARAMS = {
    "conv_layers": {
        "conv_1": {"out_channels": 8, "kernel_size": 5, "stride": 1, "padding": 0,
                   "activation": "ReLU", "batch_norm": True},
        "conv_2": {"out_channels": 8, "kernel_size": 5, "stride": 1, "padding": 0,
                   "activation": "ReLU", "batch_norm": False},
    },
    "dense_layers": {
        "dense_1": {"dimension": 32, "activation": "ReLU"},
    },
    "latent_dimension": 16,
    "sampling_layers": {"activation": "Tanh"},
}
CHARSET_LENGTH = 4   # Conv1d in_channels
MAX_LENGTH = 16      # Conv1d input length
BATCH = 2


def calculate_conv_output_size(input_size, conv_params):
    for layer_params in conv_params.values():
        k = layer_params.get("kernel_size", 3)
        s = layer_params.get("stride", 1)
        p = layer_params.get("padding", 0)
        input_size = (input_size - k + 2 * p) // s + 1
    return input_size


# ----------------------------- static shape constants -------------------------------
C0 = CHARSET_LENGTH
L0 = MAX_LENGTH
K1 = PARAMS["conv_layers"]["conv_1"]["kernel_size"]
O1 = PARAMS["conv_layers"]["conv_1"]["out_channels"]
K2 = PARAMS["conv_layers"]["conv_2"]["kernel_size"]
O2 = PARAMS["conv_layers"]["conv_2"]["out_channels"]
L1 = L0 - K1 + 1                                            # 12
L2 = L1 - K2 + 1                                            # 8
assert L2 == calculate_conv_output_size(L0, PARAMS["conv_layers"])
D1 = PARAMS["dense_layers"]["dense_1"]["dimension"]         # 32
LATENT = PARAMS["latent_dimension"]                         # 16

X_FLAT = C0 * L0                                            # 64  (PyTorch NCL flatten: c*L0 + l)
H1_W = L1 * O1                                              # 96  (lowered conv1 out: l1*O1 + o)
H2_W = L2 * O2                                              # 64  (lowered conv2 out: l2*O2 + o2)
F = H2_W                                                    # flattened conv features
S_W = 2 * LATENT                                            # 32  ([mean | logvar])
XE_W = X_FLAT + LATENT                                      # 80  ([x_flat | eps])

# ------------------------- packed-parameter slab (168 x 128) ------------------------
P_COLS = 128
M1_R0, M1_C0 = 0, 0          # (64, 96) lowered conv1
WD_R0, WD_C0 = 0, 96         # (64, 32) dense weight (rows in l2*O2 + o2 order)
M2_R0, M2_C0 = 64, 0         # (96, 64) lowered conv2
WS_R0, WS_C0 = 64, 64        # (32, 32) sampling weight
BN_SCALE_ROW = 160           # (96,) BN scale, pre-broadcast to l1*O1 + o order
BN_SHIFT_ROW = 161           # (96,) BN shift with conv1 bias folded in
B2_ROW = 162                 # (64,) conv2 bias, pre-broadcast to l2*O2 + o2 order
BD_ROW = 163                 # (32,) dense bias
BS_ROW = 164                 # (32,) sampling bias
P_ROWS = 168


# --------------------------------- Pallas kernel -----------------------------------
def moav_encoder_kernel(xe_ref, p_ref, out_ref):
    # merged data buffer: [x_flat (64 lanes) | eps (16 lanes)]
    x = xe_ref[:, 0:X_FLAT]                                      # (B, 64)
    eps = xe_ref[:, X_FLAT:X_FLAT + LATENT]                      # (B, 16)

    # static slices of the single lane-dense packed parameter slab
    m1 = p_ref[M1_R0:M1_R0 + X_FLAT, M1_C0:M1_C0 + H1_W]         # (64, 96)
    m2 = p_ref[M2_R0:M2_R0 + H1_W, M2_C0:M2_C0 + H2_W]           # (96, 64)
    wd = p_ref[WD_R0:WD_R0 + F, WD_C0:WD_C0 + D1]                # (64, 32)
    ws = p_ref[WS_R0:WS_R0 + D1, WS_C0:WS_C0 + S_W]              # (32, 32)
    bn_scale = p_ref[BN_SCALE_ROW:BN_SCALE_ROW + 1, 0:H1_W]      # (1, 96)
    bn_shift = p_ref[BN_SHIFT_ROW:BN_SHIFT_ROW + 1, 0:H1_W]      # (1, 96)
    b2 = p_ref[B2_ROW:B2_ROW + 1, 0:H2_W]                        # (1, 64)
    bd = p_ref[BD_ROW:BD_ROW + 1, 0:D1]                          # (1, 32)
    bs = p_ref[BS_ROW:BS_ROW + 1, 0:S_W]                         # (1, 32)

    # conv1 (lowered Toeplitz matmul) -> eval-mode BatchNorm affine -> ReLU
    h1 = jnp.dot(x, m1, preferred_element_type=jnp.float32)      # (B, 96)
    h1 = jnp.maximum(h1 * bn_scale + bn_shift, 0.0)

    # conv2 (lowered Toeplitz matmul) -> bias -> ReLU
    h2 = jnp.maximum(jnp.dot(h1, m2, preferred_element_type=jnp.float32) + b2, 0.0)   # (B, 64)

    # dense -> ReLU   (wd rows pre-permuted host-side, so h2 is already "flattened")
    d = jnp.maximum(jnp.dot(h2, wd, preferred_element_type=jnp.float32) + bd, 0.0)    # (B, 32)

    # sampling: Linear -> Tanh ; s = [mean | logvar]
    s = jnp.tanh(jnp.dot(d, ws, preferred_element_type=jnp.float32) + bs)             # (B, 32)

    # reparameterization: z = mean + exp(logvar/2) * eps,  eps ~ Normal(0, 0.01)
    z = s[:, 0:LATENT] + jnp.exp(0.5 * s[:, LATENT:S_W]) * eps                        # (B, 16)

    # output layout: [mean | logvar | z] — two direct stores, no lane-concat
    out_ref[:, 0:S_W] = s
    out_ref[:, S_W:S_W + LATENT] = z


# --------------------------------- host-side glue ----------------------------------
def init_torch_weights(key):
    """Random weights in native PyTorch layouts."""
    ks = jax.random.split(key, 10)
    sc = 0.1
    w1_t = sc * jax.random.normal(ks[0], (O1, C0, K1), jnp.float32)        # Conv1d (out, in, k)
    b1_t = sc * jax.random.normal(ks[1], (O1,), jnp.float32)
    gamma = 1.0 + sc * jax.random.normal(ks[2], (O1,), jnp.float32)        # BatchNorm1d weight
    beta = sc * jax.random.normal(ks[3], (O1,), jnp.float32)               # BatchNorm1d bias
    w2_t = sc * jax.random.normal(ks[4], (O2, O1, K2), jnp.float32)
    b2_t = sc * jax.random.normal(ks[5], (O2,), jnp.float32)
    wd_t = sc * jax.random.normal(ks[6], (D1, F), jnp.float32)             # Linear (out, in); in-index = c*L2 + l
    bd_t = sc * jax.random.normal(ks[7], (D1,), jnp.float32)
    ws_t = sc * jax.random.normal(ks[8], (2 * LATENT, D1), jnp.float32)
    bs_t = sc * jax.random.normal(ks[9], (2 * LATENT,), jnp.float32)
    return (w1_t, b1_t, gamma, beta, w2_t, b2_t, wd_t, bd_t, ws_t, bs_t)


def pack_params(w1_t, b1_t, gamma, beta, w2_t, b2_t, wd_t, bd_t, ws_t, bs_t,
                running_mean=None, running_var=None):
    """Host-side (one-time) repacking: lower convs to Toeplitz matrices, fold biases,
    pre-broadcast affines, and pack everything into one lane-dense (168, 128) f32 slab."""
    w1 = np.asarray(w1_t, np.float32); b1 = np.asarray(b1_t, np.float32)
    g = np.asarray(gamma, np.float32); be = np.asarray(beta, np.float32)
    w2 = np.asarray(w2_t, np.float32); b2 = np.asarray(b2_t, np.float32)
    wd_np = np.asarray(wd_t, np.float32); bd = np.asarray(bd_t, np.float32)
    ws_np = np.asarray(ws_t, np.float32); bs = np.asarray(bs_t, np.float32)
    rm = np.zeros((O1,), np.float32) if running_mean is None else np.asarray(running_mean, np.float32)
    rv = np.ones((O1,), np.float32) if running_var is None else np.asarray(running_var, np.float32)

    # lowered conv1: rows indexed c*L0 + l (PyTorch NCL flatten), cols indexed l1*O1 + o
    M1 = np.zeros((X_FLAT, H1_W), np.float32)
    for o in range(O1):
        for c in range(C0):
            for k in range(K1):
                for l1 in range(L1):
                    M1[c * L0 + (l1 + k), l1 * O1 + o] = w1[o, c, k]

    # lowered conv2: rows indexed l1*O1 + c1, cols indexed l2*O2 + o2
    M2 = np.zeros((H1_W, H2_W), np.float32)
    for o2 in range(O2):
        for c1 in range(O1):
            for k in range(K2):
                for l2 in range(L2):
                    M2[(l2 + k) * O1 + c1, l2 * O2 + o2] = w2[o2, c1, k]

    # eval-mode BatchNorm1d folded affine; conv1 bias absorbed into the shift.
    # TODO(synk): train-mode BatchNorm (batch statistics) not implemented; eval-mode affine used.
    bn_scale = g / np.sqrt(rv + 1e-5)
    bn_shift = (b1 - rm) * bn_scale + be
    bn_scale_96 = np.tile(bn_scale, L1)          # index l1*O1 + o -> bn_scale[o]
    bn_shift_96 = np.tile(bn_shift, L1)
    b2_64 = np.tile(b2, L2)                      # index l2*O2 + o2 -> b2[o2]

    # dense weight: PyTorch flatten index is o2*L2 + l2; kernel order is l2*O2 + o2 -> permute rows
    wd = np.transpose(wd_np.reshape(D1, O2, L2), (2, 1, 0)).reshape(F, D1)
    ws = np.transpose(ws_np, (1, 0))             # (D1, 2*LAT)

    P = np.zeros((P_ROWS, P_COLS), np.float32)
    P[M1_R0:M1_R0 + X_FLAT, M1_C0:M1_C0 + H1_W] = M1
    P[WD_R0:WD_R0 + F, WD_C0:WD_C0 + D1] = wd
    P[M2_R0:M2_R0 + H1_W, M2_C0:M2_C0 + H2_W] = M2
    P[WS_R0:WS_R0 + D1, WS_C0:WS_C0 + S_W] = ws
    P[BN_SCALE_ROW, 0:H1_W] = bn_scale_96
    P[BN_SHIFT_ROW, 0:H1_W] = bn_shift_96
    P[B2_ROW, 0:H2_W] = b2_64
    P[BD_ROW, 0:D1] = bd
    P[BS_ROW, 0:S_W] = bs
    return jnp.asarray(P)


@jax.jit
def moav_encoder_forward(x_ncl, packed_params, eps_noise):
    """x_ncl: (batch, charset_length, max_length) — PyTorch Conv1d NCL layout."""
    B = x_ncl.shape[0]
    x_flat = x_ncl.astype(jnp.float32).reshape(B, X_FLAT)            # NCL flatten: c*L0 + l
    xe = jnp.concatenate([x_flat, eps_noise.astype(jnp.float32)], axis=-1)   # (B, 80)
    out = pl.pallas_call(
        moav_encoder_kernel,
        out_shape=jax.ShapeDtypeStruct((B, 3 * LATENT), jnp.float32),
        in_specs=[pl.BlockSpec(memory_space=pltpu.MemorySpace.VMEM)] * 2,
        out_specs=pl.BlockSpec(memory_space=pltpu.MemorySpace.VMEM),
    )(xe, packed_params)
    z_mean = out[:, :LATENT]
    z_log_var = out[:, LATENT:2 * LATENT]
    z = out[:, 2 * LATENT:]
    return z, z_mean, z_log_var


# ------------------------- pure-JAX reference (for verification) --------------------
def _ref_conv1d(x, w, b):
    # x: (B, Cin, L), w: (Cout, Cin, K), b: (Cout,)   "valid" conv, stride 1
    K = w.shape[2]
    Lout = x.shape[2] - K + 1
    cols = jnp.stack([x[:, :, k:k + Lout] for k in range(K)], axis=-1)   # (B, Cin, Lout, K)
    return jnp.einsum("bclk,ock->bol", cols, w) + b[None, :, None]


def reference_forward(x_ncl, eps_noise, weights):
    w1_t, b1_t, gamma, beta, w2_t, b2_t, wd_t, bd_t, ws_t, bs_t = weights
    h = _ref_conv1d(x_ncl, w1_t, b1_t)
    # eval-mode BatchNorm1d with default running stats (mean=0, var=1)
    h = gamma[None, :, None] * h / jnp.sqrt(1.0 + 1e-5) + beta[None, :, None]
    h = jnp.maximum(h, 0.0)
    h = jnp.maximum(_ref_conv1d(h, w2_t, b2_t), 0.0)
    flat = h.reshape(h.shape[0], -1)                                    # PyTorch flatten: o2*L2 + l2
    d = jnp.maximum(flat @ wd_t.T + bd_t, 0.0)
    s = jnp.tanh(d @ ws_t.T + bs_t)
    z_mean, z_log_var = s[:, :LATENT], s[:, LATENT:]
    z = z_mean + jnp.exp(0.5 * z_log_var) * eps_noise
    return z, z_mean, z_log_var


if __name__ == "__main__":
    key = jax.random.PRNGKey(0)
    k_x, k_eps, k_w = jax.random.split(key, 3)

    # input in PyTorch Conv1d layout: (batch, charset_length, max_length)
    x = jax.random.normal(k_x, (BATCH, CHARSET_LENGTH, MAX_LENGTH), jnp.float32)
    # epsilon ~ Normal(0, 0.01): torch's second arg is the scale (std-dev), sampled host-side
    eps_noise = 0.01 * jax.random.normal(k_eps, (BATCH, LATENT), jnp.float32)
    weights = init_torch_weights(k_w)
    packed = pack_params(*weights)

    z, z_mean, z_log_var = moav_encoder_forward(x, packed, eps_noise)
    jax.block_until_ready((z, z_mean, z_log_var))

    assert z.shape == (BATCH, LATENT)
    assert z_mean.shape == (BATCH, LATENT)
    assert z_log_var.shape == (BATCH, LATENT)

    # verify against a pure-JAX reference of the PyTorch forward (eval-mode BN)
    z_r, m_r, lv_r = reference_forward(x, eps_noise, weights)
    assert np.allclose(np.asarray(z_mean), np.asarray(m_r), atol=2e-3, rtol=2e-3)
    assert np.allclose(np.asarray(z_log_var), np.asarray(lv_r), atol=2e-3, rtol=2e-3)
    assert np.allclose(np.asarray(z), np.asarray(z_r), atol=2e-3, rtol=2e-3)

    print("KERNEL_OK")
</pallas_src>

<mosaic_0001>
module attributes {stable_mosaic.version = 11 : i64} {
  func.func @moav_encoder_kernel(%arg0: memref<2x80xf32, #tpu.memory_space<vmem>>, %arg1: memref<168x128xf32, #tpu.memory_space<vmem>>, %arg2: memref<2x48xf32, #tpu.memory_space<vmem>>) attributes {dimension_semantics = [], scalar_prefetch = 0 : i64, scratch_operands = 0 : i64, tpu.core_type = #tpu.core_type<tc>} {
    %c0 = arith.constant 0 : index
    %c0_0 = arith.constant 0 : index
    %0 = vector.load %arg0[%c0, %c0_0] : memref<2x80xf32, #tpu.memory_space<vmem>>, vector<2x64xf32>
    %c0_1 = arith.constant 0 : index
    %c64 = arith.constant 64 : index
    %1 = vector.load %arg0[%c0_1, %c64] : memref<2x80xf32, #tpu.memory_space<vmem>>, vector<2x16xf32>
    %c0_2 = arith.constant 0 : index
    %c0_3 = arith.constant 0 : index
    %2 = vector.load %arg1[%c0_2, %c0_3] : memref<168x128xf32, #tpu.memory_space<vmem>>, vector<64x96xf32>
    %c64_4 = arith.constant 64 : index
    %c0_5 = arith.constant 0 : index
    %3 = vector.load %arg1[%c64_4, %c0_5] : memref<168x128xf32, #tpu.memory_space<vmem>>, vector<96x64xf32>
    %c0_6 = arith.constant 0 : index
    %c96 = arith.constant 96 : index
    %4 = vector.load %arg1[%c0_6, %c96] : memref<168x128xf32, #tpu.memory_space<vmem>>, vector<64x32xf32>
    %c64_7 = arith.constant 64 : index
    %c64_8 = arith.constant 64 : index
    %5 = vector.load %arg1[%c64_7, %c64_8] : memref<168x128xf32, #tpu.memory_space<vmem>>, vector<32x32xf32>
    %c160 = arith.constant 160 : index
    %c0_9 = arith.constant 0 : index
    %6 = vector.load %arg1[%c160, %c0_9] : memref<168x128xf32, #tpu.memory_space<vmem>>, vector<1x96xf32>
    %c161 = arith.constant 161 : index
    %c0_10 = arith.constant 0 : index
    %7 = vector.load %arg1[%c161, %c0_10] : memref<168x128xf32, #tpu.memory_space<vmem>>, vector<1x96xf32>
    %c162 = arith.constant 162 : index
    %c0_11 = arith.constant 0 : index
    %8 = vector.load %arg1[%c162, %c0_11] : memref<168x128xf32, #tpu.memory_space<vmem>>, vector<1x64xf32>
    %c163 = arith.constant 163 : index
    %c0_12 = arith.constant 0 : index
    %9 = vector.load %arg1[%c163, %c0_12] : memref<168x128xf32, #tpu.memory_space<vmem>>, vector<1x32xf32>
    %c164 = arith.constant 164 : index
    %c0_13 = arith.constant 0 : index
    %10 = vector.load %arg1[%c164, %c0_13] : memref<168x128xf32, #tpu.memory_space<vmem>>, vector<1x32xf32>
    %cst = arith.constant dense<0.000000e+00> : vector<2x96xf32>
    %11 = tpu.matmul %0, %2, %cst {dimension_numbers = #tpu.dot_dimension_numbers<[1], [0], [0], [1], [0, 0, 1, 1], [], []>} : vector<2x64xf32>, vector<64x96xf32>, vector<2x96xf32> -> vector<2x96xf32>
    %12 = vector.broadcast %6 : vector<1x96xf32> to vector<2x96xf32>
    %13 = arith.mulf %11, %12 : vector<2x96xf32>
    %14 = vector.broadcast %7 : vector<1x96xf32> to vector<2x96xf32>
    %15 = arith.addf %13, %14 : vector<2x96xf32>
    %cst_14 = arith.constant 0.000000e+00 : f32
    %16 = vector.broadcast %cst_14 : f32 to vector<2x96xf32>
    %17 = arith.maximumf %15, %16 : vector<2x96xf32>
    %cst_15 = arith.constant dense<0.000000e+00> : vector<2x64xf32>
    %18 = tpu.matmul %17, %3, %cst_15 {dimension_numbers = #tpu.dot_dimension_numbers<[1], [0], [0], [1], [0, 0, 1, 1], [], []>} : vector<2x96xf32>, vector<96x64xf32>, vector<2x64xf32> -> vector<2x64xf32>
    %19 = vector.broadcast %8 : vector<1x64xf32> to vector<2x64xf32>
    %20 = arith.addf %18, %19 : vector<2x64xf32>
    %cst_16 = arith.constant 0.000000e+00 : f32
    %21 = vector.broadcast %cst_16 : f32 to vector<2x64xf32>
    %22 = arith.maximumf %20, %21 : vector<2x64xf32>
    %cst_17 = arith.constant dense<0.000000e+00> : vector<2x32xf32>
    %23 = tpu.matmul %22, %4, %cst_17 {dimension_numbers = #tpu.dot_dimension_numbers<[1], [0], [0], [1], [0, 0, 1, 1], [], []>} : vector<2x64xf32>, vector<64x32xf32>, vector<2x32xf32> -> vector<2x32xf32>
    %24 = vector.broadcast %9 : vector<1x32xf32> to vector<2x32xf32>
    %25 = arith.addf %23, %24 : vector<2x32xf32>
    %cst_18 = arith.constant 0.000000e+00 : f32
    %26 = vector.broadcast %cst_18 : f32 to vector<2x32xf32>
    %27 = arith.maximumf %25, %26 : vector<2x32xf32>
    %cst_19 = arith.constant dense<0.000000e+00> : vector<2x32xf32>
    %28 = tpu.matmul %27, %5, %cst_19 {dimension_numbers = #tpu.dot_dimension_numbers<[1], [0], [0], [1], [0, 0, 1, 1], [], []>} : vector<2x32xf32>, vector<32x32xf32>, vector<2x32xf32> -> vector<2x32xf32>
    %29 = vector.broadcast %10 : vector<1x32xf32> to vector<2x32xf32>
    %30 = arith.addf %28, %29 : vector<2x32xf32>
    %31 = math.tanh %30 : vector<2x32xf32>
    %32 = vector.extract_strided_slice %31 {offsets = [0, 0], sizes = [2, 16], strides = [1, 1]} : vector<2x32xf32> to vector<2x16xf32>
    %33 = vector.extract_strided_slice %31 {offsets = [0, 16], sizes = [2, 16], strides = [1, 1]} : vector<2x32xf32> to vector<2x16xf32>
    %cst_20 = arith.constant 5.000000e-01 : f32
    %34 = vector.broadcast %cst_20 : f32 to vector<2x16xf32>
    %35 = arith.mulf %34, %33 : vector<2x16xf32>
    %36 = math.exp %35 : vector<2x16xf32>
    %37 = arith.mulf %36, %1 : vector<2x16xf32>
    %38 = arith.addf %32, %37 : vector<2x16xf32>
    %c0_21 = arith.constant 0 : index
    %c0_22 = arith.constant 0 : index
    %39 = vector.load %arg2[%c0_21, %c0_22] : memref<2x48xf32, #tpu.memory_space<vmem>>, vector<2x32xf32>
    tpu.vector_store %arg2[%c0_21, %c0_22], %31 {strides = array<i32>} : memref<2x48xf32, #tpu.memory_space<vmem>>, vector<2x32xf32>,
    %c0_23 = arith.constant 0 : index
    %c32 = arith.constant 32 : index
    %40 = vector.load %arg2[%c0_23, %c32] : memref<2x48xf32, #tpu.memory_space<vmem>>, vector<2x16xf32>
    tpu.vector_store %arg2[%c0_23, %c32], %38 {strides = array<i32>} : memref<2x48xf32, #tpu.memory_space<vmem>>, vector<2x16xf32>,
    return
  }
}

</mosaic_0001>

<llo_original>
// kernel: moav_encoder_forward.1
$region0: #{moav_encoder_forward.1}
  #allocation0 [shape = 'u32[]', space=smem, size = 0x4, offset = 0x4, fixed_abs, tag = 'smem constant byte address 0x4 - core index']
  #allocation1 [shape = 'u32[144,128]{1,0:T(1,128)}', space=vmem, size = 0x12000, scoped, tag = 'internal scratch']
  %s0 = inlined_call_operand.vmem [shape: f32[2,80], index: 0, kind: input, shape index: {}]
  %s1 = inlined_call_operand.hbm [shape: f32[168,128], index: 1, kind: input, shape index: {}]
  %s2 = inlined_call_operand.vmem [shape: f32[2,48], index: 2, kind: output, shape index: {}]
  %s3 = sld [smem:[#allocation0]]
  $region22: #{moav_encoder_forward.1} parent=0
    _
  %s5 = ssub.s32 1, %s3
  %s6 = scalar_select 0, %s5, %s3
  $region1: #{moav_encoder_forward.1} parent=0
    #allocation2 [shape = 'u8[86016]{0}', space=vmem, size = 0x15000, scoped, tag = 'input window, operand 1, single buffered']
    #allocation3 [shape = 's32[1]{0}', space=sflag, size = 0x4, scoped, tag = 'scoped memory for moav_encoder_forward.1']
    %7 = vsyncpa [#allocation3], 0
    // Predicated region
    $region2: #{moav_encoder_forward.1} parent=1 // pred_check
      _
    $region3: #{moav_encoder_forward.1} parent=1 // pred_check_branch
      %9 = sbr.rel (0) target = $region5
    $region4: #{moav_encoder_forward.1} parent=1 // pred_region
      _
    $region5: #{moav_encoder_forward.1} parent=1 // pred_fallthru
      _
    // Predicated region
    $region6: #{moav_encoder_forward.1} parent=1 // pred_check
      _
    $region7: #{moav_encoder_forward.1} parent=1 // pred_check_branch
      %11 = sbr.rel (0) target = $region9
    $region8: #{moav_encoder_forward.1} parent=1 // pred_region
      %s13 = ssub.s32 2688, 2688
      %14 = vsyncadd [#allocation3], %s13
      %s15 = sshll.u32 [#allocation2], 4
      %s16 = int_to_ptr.vmem [resolvable:$true] %s15
      %21 = dma.hbm_to_vmem [thread:$0]  %s1, 2688, %s16, [#allocation3], 128, 128, 8
    $region9: #{moav_encoder_forward.1} parent=1 // pred_fallthru
      _
    // Predicated region
    $region10: #{moav_encoder_forward.1} parent=1 // pred_check
      _
    $region11: #{moav_encoder_forward.1} parent=1 // pred_check_branch
      %23 = sbr.rel (0) target = $region13
    $region12: #{moav_encoder_forward.1} parent=1 // pred_region
      %24 = dma.done [#allocation3], 2688
    $region13: #{moav_encoder_forward.1} parent=1 // pred_fallthru
      _
    %v25 = vld [vmem:[%s0] sm:$0x3]
    %v26 = vld [vmem:[#allocation2] sm:$0xff]
    %v27 = vld [vmem:[#allocation2 + $0x8] sm:$0xff]
    %v28 = vld [vmem:[#allocation2 + $0x10] sm:$0xff]
    %v29 = vld [vmem:[#allocation2 + $0x18] sm:$0xff]
    %v30 = vld [vmem:[#allocation2 + $0x20] sm:$0xff]
    %v31 = vld [vmem:[#allocation2 + $0x28] sm:$0xff]
    %v32 = vld [vmem:[#allocation2 + $0x30] sm:$0xff]
    %v33 = vld [vmem:[#allocation2 + $0x38] sm:$0xff]
    %v34 = vld [vmem:[#allocation2 + $0x40] sm:$0xff]
    %v35 = vld [vmem:[#allocation2 + $0x48] sm:$0xff]
    %v36 = vld [vmem:[#allocation2 + $0x50] sm:$0xff]
    %v37 = vld [vmem:[#allocation2 + $0x58] sm:$0xff]
    %v38 = vld [vmem:[#allocation2 + $0x60] sm:$0xff]
    %v39 = vld [vmem:[#allocation2 + $0x68] sm:$0xff]
    %v40 = vld [vmem:[#allocation2 + $0x70] sm:$0xff]
    %v41 = vld [vmem:[#allocation2 + $0x78] sm:$0xff]
    %v42 = vld [vmem:[#allocation2 + $0x80] sm:$0xff]
    %v43 = vld [vmem:[#allocation2 + $0x88] sm:$0xff]
    %v44 = vld [vmem:[#allocation2 + $0x90] sm:$0xff]
    %v45 = vld [vmem:[#allocation2 + $0x98] sm:$0xff]
    %v46 = vld [vmem:[#allocation2 + $0xa0] sm:$0x1]
    %v47 = vld [vmem:[#allocation2 + $0xa1] sm:$0x1]
    %v48 = vld [vmem:[#allocation2 + $0xa2] sm:$0x1]
    %v49 = vld [vmem:[#allocation2 + $0xa3] sm:$0x1]
    %v50 = vld [vmem:[#allocation2 + $0xa4] sm:$0x1]
    %vm51 = vcmask 523264
    %v53 = vsel %vm51, %v25, 0
    %55 = vmatprep.subr.mxu0 0.0
    %56 = vmatpush1.msra.mxu0 0.0
    %57 = vmatprep.subr.mxu0 0.0
    %58 = vmatpush1.msra.mxu0 0.0
    %59 = vmatprep.subr.mxu0 0.0
    %60 = vmatpush1.msra.mxu0 0.0
    %61 = vmatprep.subr.mxu0 0.0
    %62 = vmatpush1.msra.mxu0 0.0
    %63 = vmatprep.subr.mxu0 0.0
    %64 = vmatpush1.msra.mxu0 0.0
    %65 = vmatprep.subr.mxu0 0.0
    %66 = vmatpush1.msra.mxu0 0.0
    %67 = vmatprep.subr.mxu0 0.0
    %68 = vmatpush1.msra.mxu0 0.0
    %69 = vmatprep.subr.mxu0 0.0
    %70 = vmatpush1.msra.mxu0 0.0
    %71 = vmatprep.subr.mxu0 0.0
    %72 = vmatpush1.msra.mxu0 %v33
    %73 = vmatprep.subr.mxu0 0.0
    %74 = vmatpush1.msra.mxu0 %v32
    %75 = vmatprep.subr.mxu0 0.0
    %76 = vmatpush1.msra.mxu0 %v31
    %77 = vmatprep.subr.mxu0 0.0
    %78 = vmatpush1.msra.mxu0 %v30
    %79 = vmatprep.subr.mxu0 0.0
    %80 = vmatpush1.msra.mxu0 %v29
    %81 = vmatprep.subr.mxu0 0.0
    %82 = vmatpush1.msra.mxu0 %v28
    %83 = vmatprep.subr.mxu0 0.0
    %84 = vmatpush1.msra.mxu0 %v27
    %85 = vmatprep.subr.mxu0 0.0
    %86 = vmatpush1.msra.mxu0 %v26
    %87 = vmatprep.subr.mxu0 0.0
    %88 = vmatpush2.msra.mxu0 0.0
    %89 = vmatprep.subr.mxu0 0.0
    %90 = vmatpush2.msra.mxu0 0.0
    %91 = vmatprep.subr.mxu0 0.0
    %92 = vmatpush2.msra.mxu0 0.0
    %93 = vmatprep.subr.mxu0 0.0
    %94 = vmatpush2.msra.mxu0 0.0
    %95 = vmatprep.subr.mxu0 0.0
    %96 = vmatpush2.msra.mxu0 0.0
    %97 = vmatprep.subr.mxu0 0.0
    %98 = vmatpush2.msra.mxu0 0.0
    %99 = vmatprep.subr.mxu0 0.0
    %100 = vmatpush2.msra.mxu0 0.0
    %101 = vmatprep.subr.mxu0 0.0
    %102 = vmatpush2.msra.mxu0 0.0
    %103 = vmatprep.subr.mxu0 0.0
    %104 = vmatpush2.msra.mxu0 0.0
    %105 = vmatprep.subr.mxu0 0.0
    %106 = vmatpush2.msra.mxu0 0.0
    %107 = vmatprep.subr.mxu0 0.0
    %108 = vmatpush2.msra.mxu0 0.0
    %109 = vmatprep.subr.mxu0 0.0
    %110 = vmatpush2.msra.mxu0 0.0
    %111 = vmatprep.subr.mxu0 0.0
    %112 = vmatpush2.msra.mxu0 0.0
    %113 = vmatprep.subr.mxu0 0.0
    %114 = vmatpush2.msra.mxu0 0.0
    %115 = vmatprep.subr.mxu0 0.0
    %116 = vmatpush2.msra.mxu0 0.0
    %117 = vmatprep.subr.mxu0 0.0
    %118 = vmatpush2.msra.mxu0 0.0
    %119 = vmatprep.mubr.f32.mxu0 0.0
    %120 = vmatmul.mubr.f32.gmra.mxu0 %v53
    %v121 = vpop.f32.mrf.mxu0
    %v122 = vadd.f32 0.0, %v121
    %v123 = vpop.f32.mrf.mxu0
    %124 = vdwg.mxu0
    %v125 = vlaneseq
    %v126 = vshrl.u32 %v125, 7
    %v127 = vsub.s32 0, %v126
    %v128 = vrot.slane %v46, %v127
    %v129 = vmul.f32 %v122, %v128
    %v130 = vlaneseq
    %v131 = vshrl.u32 %v130, 7
    %v132 = vsub.s32 0, %v131
    %v133 = vrot.slane %v47, %v132
    %v134 = vadd.f32 %v129, %v133
    %v135 = vmax.f32 %v134, 0.0
    %v136 = vlaneseq
    %v137 = vshrl.u32 %v136, 7
    %v138 = vsub.s32 0, %v137
    %v139 = vrot.slane %v48, %v138
    %vm140 = vcmask 785408
    %v142 = vsel %vm140, %v135, 0
    %144 = vmatprep.subr.mxu0 0.0
    %145 = vmatpush1.msra.mxu0 0.0
    %146 = vmatprep.subr.mxu0 0.0
    %147 = vmatpush1.msra.mxu0 0.0
    %148 = vmatprep.subr.mxu0 0.0
    %149 = vmatpush1.msra.mxu0 0.0
    %150 = vmatprep.subr.mxu0 0.0
    %151 = vmatpush1.msra.mxu0 0.0
    %152 = vmatprep.subr.mxu0 0.0
    %153 = vmatpush1.msra.mxu0 %v45
    %154 = vmatprep.subr.mxu0 0.0
    %155 = vmatpush1.msra.mxu0 %v44
    %156 = vmatprep.subr.mxu0 0.0
    %157 = vmatpush1.msra.mxu0 %v43
    %158 = vmatprep.subr.mxu0 0.0
    %159 = vmatpush1.msra.mxu0 %v42
    %160 = vmatprep.subr.mxu0 0.0
    %161 = vmatpush1.msra.mxu0 %v41
    %162 = vmatprep.subr.mxu0 0.0
    %163 = vmatpush1.msra.mxu0 %v40
    %164 = vmatprep.subr.mxu0 0.0
    %165 = vmatpush1.msra.mxu0 %v39
    %166 = vmatprep.subr.mxu0 0.0
    %167 = vmatpush1.msra.mxu0 %v38
    %168 = vmatprep.subr.mxu0 0.0
    %169 = vmatpush1.msra.mxu0 %v37
    %170 = vmatprep.subr.mxu0 0.0
    %171 = vmatpush1.msra.mxu0 %v36
    %172 = vmatprep.subr.mxu0 0.0
    %173 = vmatpush1.msra.mxu0 %v35
    %174 = vmatprep.subr.mxu0 0.0
    %175 = vmatpush1.msra.mxu0 %v34
    %176 = vmatprep.subr.mxu0 0.0
    %177 = vmatpush2.msra.mxu0 0.0
    %178 = vmatprep.subr.mxu0 0.0
    %179 = vmatpush2.msra.mxu0 0.0
    %180 = vmatprep.subr.mxu0 0.0
    %181 = vmatpush2.msra.mxu0 0.0
    %182 = vmatprep.subr.mxu0 0.0
    %183 = vmatpush2.msra.mxu0 0.0
    %184 = vmatprep.subr.mxu0 0.0
    %185 = vmatpush2.msra.mxu0 0.0
    %186 = vmatprep.subr.mxu0 0.0
    %187 = vmatpush2.msra.mxu0 0.0
    %188 = vmatprep.subr.mxu0 0.0
    %189 = vmatpush2.msra.mxu0 0.0
    %190 = vmatprep.subr.mxu0 0.0
    %191 = vmatpush2.msra.mxu0 0.0
    %192 = vmatprep.subr.mxu0 0.0
    %193 = vmatpush2.msra.mxu0 0.0
    %194 = vmatprep.subr.mxu0 0.0
    %195 = vmatpush2.msra.mxu0 0.0
    %196 = vmatprep.subr.mxu0 0.0
    %197 = vmatpush2.msra.mxu0 0.0
    %198 = vmatprep.subr.mxu0 0.0
    %199 = vmatpush2.msra.mxu0 0.0
    %200 = vmatprep.subr.mxu0 0.0
    %201 = vmatpush2.msra.mxu0 0.0
    %202 = vmatprep.subr.mxu0 0.0
    %203 = vmatpush2.msra.mxu0 0.0
    %204 = vmatprep.subr.mxu0 0.0
    %205 = vmatpush2.msra.mxu0 0.0
    %206 = vmatprep.subr.mxu0 0.0
    %207 = vmatpush2.msra.mxu0 0.0
    %208 = vmatprep.mubr.f32.mxu0 0.0
    %209 = vmatmul.mubr.f32.gmra.mxu0 %v142
    %v210 = vpop.f32.mrf.mxu0
    %v211 = vadd.f32 %v139, %v210
    %v212 = vpop.f32.mrf.mxu0
    %213 = vdwg.mxu0
    %v214 = vmax.f32 %v211, 0.0
    %v215 = vlaneseq
    %v216 = vshrl.u32 %v215, 7
    %v217 = vsub.s32 0, %v216
    %v218 = vrot.slane %v49, %v217
    %227 = vrot.lane.b32.xlu0 %v26, 32
    %v228 = vpop.permute.xlu0 %227
    %229 = vrot.lane.b32.xlu0 %v27, 32
    %v230 = vpop.permute.xlu0 %229
    %231 = vrot.lane.b32.xlu0 %v28, 32
    %v232 = vpop.permute.xlu0 %231
    %233 = vrot.lane.b32.xlu0 %v29, 32
    %v234 = vpop.permute.xlu0 %233
    %235 = vrot.lane.b32.xlu0 %v30, 32
    %v236 = vpop.permute.xlu0 %235
    %237 = vrot.lane.b32.xlu0 %v31, 32
    %v238 = vpop.permute.xlu0 %237
    %239 = vrot.lane.b32.xlu0 %v32, 32
    %v240 = vpop.permute.xlu0 %239
    %241 = vrot.lane.b32.xlu0 %v33, 32
    %v242 = vpop.permute.xlu0 %241
    %v252 = vsel %vm51, %v214, 0
    %254 = vmatprep.subr.mxu0 0.0
    %255 = vmatpush1.msra.mxu0 0.0
    %256 = vmatprep.subr.mxu0 0.0
    %257 = vmatpush1.msra.mxu0 0.0
    %258 = vmatprep.subr.mxu0 0.0
    %259 = vmatpush1.msra.mxu0 0.0
    %260 = vmatprep.subr.mxu0 0.0
    %261 = vmatpush1.msra.mxu0 0.0
    %262 = vmatprep.subr.mxu0 0.0
    %263 = vmatpush1.msra.mxu0 0.0
    %264 = vmatprep.subr.mxu0 0.0
    %265 = vmatpush1.msra.mxu0 0.0
    %266 = vmatprep.subr.mxu0 0.0
    %267 = vmatpush1.msra.mxu0 0.0
    %268 = vmatprep.subr.mxu0 0.0
    %269 = vmatpush1.msra.mxu0 0.0
    %270 = vmatprep.subr.mxu0 0.0
    %271 = vmatpush1.msra.mxu0 %v242
    %272 = vmatprep.subr.mxu0 0.0
    %273 = vmatpush1.msra.mxu0 %v240
    %274 = vmatprep.subr.mxu0 0.0
    %275 = vmatpush1.msra.mxu0 %v238
    %276 = vmatprep.subr.mxu0 0.0
    %277 = vmatpush1.msra.mxu0 %v236
    %278 = vmatprep.subr.mxu0 0.0
    %279 = vmatpush1.msra.mxu0 %v234
    %280 = vmatprep.subr.mxu0 0.0
    %281 = vmatpush1.msra.mxu0 %v232
    %282 = vmatprep.subr.mxu0 0.0
    %283 = vmatpush1.msra.mxu0 %v230
    %284 = vmatprep.subr.mxu0 0.0
    %285 = vmatpush1.msra.mxu0 %v228
    %286 = vmatprep.subr.mxu0 0.0
    %287 = vmatpush2.msra.mxu0 0.0
    %288 = vmatprep.subr.mxu0 0.0
    %289 = vmatpush2.msra.mxu0 0.0
    %290 = vmatprep.subr.mxu0 0.0
    %291 = vmatpush2.msra.mxu0 0.0
    %292 = vmatprep.subr.mxu0 0.0
    %293 = vmatpush2.msra.mxu0 0.0
    %294 = vmatprep.subr.mxu0 0.0
    %295 = vmatpush2.msra.mxu0 0.0
    %296 = vmatprep.subr.mxu0 0.0
    %297 = vmatpush2.msra.mxu0 0.0
    %298 = vmatprep.subr.mxu0 0.0
    %299 = vmatpush2.msra.mxu0 0.0
    %300 = vmatprep.subr.mxu0 0.0
    %301 = vmatpush2.msra.mxu0 0.0
    %302 = vmatprep.subr.mxu0 0.0
    %303 = vmatpush2.msra.mxu0 0.0
    %304 = vmatprep.subr.mxu0 0.0
    %305 = vmatpush2.msra.mxu0 0.0
    %306 = vmatprep.subr.mxu0 0.0
    %307 = vmatpush2.msra.mxu0 0.0
    %308 = vmatprep.subr.mxu0 0.0
    %309 = vmatpush2.msra.mxu0 0.0
    %310 = vmatprep.subr.mxu0 0.0
    %311 = vmatpush2.msra.mxu0 0.0
    %312 = vmatprep.subr.mxu0 0.0
    %313 = vmatpush2.msra.mxu0 0.0
    %314 = vmatprep.subr.mxu0 0.0
    %315 = vmatpush2.msra.mxu0 0.0
    %316 = vmatprep.subr.mxu0 0.0
    %317 = vmatpush2.msra.mxu0 0.0
    %318 = vmatprep.mubr.f32.mxu0 0.0
    %319 = vmatmul.mubr.f32.gmra.mxu0 %v252
    %v320 = vpop.f32.mrf.mxu0
    %v321 = vadd.f32 %v218, %v320
    %v322 = vpop.f32.mrf.mxu0
    %323 = vdwg.mxu0
    %v324 = vmax.f32 %v321, 0.0
    %v325 = vlaneseq
    %v326 = vshrl.u32 %v325, 7
    %v327 = vsub.s32 0, %v326
    %v328 = vrot.slane %v50, %v327
    %333 = vrot.lane.b32.xlu0 %v34, 64
    %v334 = vpop.permute.xlu0 %333
    %335 = vrot.lane.b32.xlu0 %v35, 64
    %v336 = vpop.permute.xlu0 %335
    %337 = vrot.lane.b32.xlu0 %v36, 64
    %v338 = vpop.permute.xlu0 %337
    %339 = vrot.lane.b32.xlu0 %v37, 64
    %v340 = vpop.permute.xlu0 %339
    %vm345 = vcmask 261120
    %v347 = vsel %vm345, %v324, 0
    %349 = vmatprep.subr.mxu0 0.0
    %350 = vmatpush1.msra.mxu0 0.0
    %351 = vmatprep.subr.mxu0 0.0
    %352 = vmatpush1.msra.mxu0 0.0
    %353 = vmatprep.subr.mxu0 0.0
    %354 = vmatpush1.msra.mxu0 0.0
    %355 = vmatprep.subr.mxu0 0.0
    %356 = vmatpush1.msra.mxu0 0.0
    %357 = vmatprep.subr.mxu0 0.0
    %358 = vmatpush1.msra.mxu0 0.0
    %359 = vmatprep.subr.mxu0 0.0
    %360 = vmatpush1.msra.mxu0 0.0
    %361 = vmatprep.subr.mxu0 0.0
    %362 = vmatpush1.msra.mxu0 0.0
    %363 = vmatprep.subr.mxu0 0.0
    %364 = vmatpush1.msra.mxu0 0.0
    %365 = vmatprep.subr.mxu0 0.0
    %366 = vmatpush1.msra.mxu0 0.0
    %367 = vmatprep.subr.mxu0 0.0
    %368 = vmatpush1.msra.mxu0 0.0
    %369 = vmatprep.subr.mxu0 0.0
    %370 = vmatpush1.msra.mxu0 0.0
    %371 = vmatprep.subr.mxu0 0.0
    %372 = vmatpush1.msra.mxu0 0.0
    %373 = vmatprep.subr.mxu0 0.0
    %374 = vmatpush1.msra.mxu0 %v340
    %375 = vmatprep.subr.mxu0 0.0
    %376 = vmatpush1.msra.mxu0 %v338
    %377 = vmatprep.subr.mxu0 0.0
    %378 = vmatpush1.msra.mxu0 %v336
    %379 = vmatprep.subr.mxu0 0.0
    %380 = vmatpush1.msra.mxu0 %v334
    %381 = vmatprep.subr.mxu0 0.0
    %382 = vmatpush2.msra.mxu0 0.0
    %383 = vmatprep.subr.mxu0 0.0
    %384 = vmatpush2.msra.mxu0 0.0
    %385 = vmatprep.subr.mxu0 0.0
    %386 = vmatpush2.msra.mxu0 0.0
    %387 = vmatprep.subr.mxu0 0.0
    %388 = vmatpush2.msra.mxu0 0.0
    %389 = vmatprep.subr.mxu0 0.0
    %390 = vmatpush2.msra.mxu0 0.0
    %391 = vmatprep.subr.mxu0 0.0
    %392 = vmatpush2.msra.mxu0 0.0
    %393 = vmatprep.subr.mxu0 0.0
    %394 = vmatpush2.msra.mxu0 0.0
    %395 = vmatprep.subr.mxu0 0.0
    %396 = vmatpush2.msra.mxu0 0.0
    %397 = vmatprep.subr.mxu0 0.0
    %398 = vmatpush2.msra.mxu0 0.0
    %399 = vmatprep.subr.mxu0 0.0
    %400 = vmatpush2.msra.mxu0 0.0
    %401 = vmatprep.subr.mxu0 0.0
    %402 = vmatpush2.msra.mxu0 0.0
    %403 = vmatprep.subr.mxu0 0.0
    %404 = vmatpush2.msra.mxu0 0.0
    %405 = vmatprep.subr.mxu0 0.0
    %406 = vmatpush2.msra.mxu0 0.0
    %407 = vmatprep.subr.mxu0 0.0
    %408 = vmatpush2.msra.mxu0 0.0
    %409 = vmatprep.subr.mxu0 0.0
    %410 = vmatpush2.msra.mxu0 0.0
    %411 = vmatprep.subr.mxu0 0.0
    %412 = vmatpush2.msra.mxu0 0.0
    %413 = vmatprep.mubr.f32.mxu0 0.0
    %414 = vmatmul.mubr.f32.gmra.mxu0 %v347
    %v415 = vpop.f32.mrf.mxu0
    %v416 = vadd.f32 %v328, %v415
    %v417 = vpop.f32.mrf.mxu0
    %418 = vdwg.mxu0
    %v419 = vtanh.pop %v416
    %v420 = vmul.f32 %v419, 0.5
    %v421 = vmul.f32 %v420, 1.442695
    %v422 = vpow.pop %v421
    %423 = vrot.lane.b32.xlu0 %v25, 80
    %v424 = vpop.permute.xlu0 %423
    %v426 = vmul.f32 %v422, %v424
    %428 = vrot.lane.b32.xlu0 %v426, 112
    %v429 = vpop.permute.xlu0 %428
    %v431 = vadd.f32 %v419, %v429
    %vm432 = vcmask 254976
    %433 = vst.msk [vmem:[%s2] sm:$0x3] %vm432, %v419
    %435 = vrot.lane.b32.xlu0 %v431, 32
    %v436 = vpop.permute.xlu0 %435
    %vm438 = vcmask 386304
    %439 = vst.msk [vmem:[%s2] sm:$0x3] %vm438, %v436
    // Predicated region
    $region14: #{moav_encoder_forward.1} parent=1 // pred_check
      _
    $region15: #{moav_encoder_forward.1} parent=1 // pred_check_branch
      %441 = sbr.rel (0) target = $region17
    $region16: #{moav_encoder_forward.1} parent=1 // pred_region
      _
    $region17: #{moav_encoder_forward.1} parent=1 // pred_fallthru
      _
    // Predicated region
    $region18: #{moav_encoder_forward.1} parent=1 // pred_check
      _
    $region19: #{moav_encoder_forward.1} parent=1 // pred_check_branch
      %443 = sbr.rel (0) target = $region21
    $region20: #{moav_encoder_forward.1} parent=1 // pred_region
      _
    $region21: #{moav_encoder_forward.1} parent=1 // pred_fallthru
      _
    %444 = vsyncpa [#allocation3], 1

</llo_original>
